<compile_context>
chip_gen: v7x
topology: tpu7x:2x2x1
jax: 0.10.0
libtpu: 0.0.40
codegen_flags: <defaults>
</compile_context>

<pallas_src>
import math

import jax
import jax.numpy as jnp
from jax.experimental import pallas as pl
from jax.experimental.pallas import tpu as pltpu

HIDDEN = 100          # logical hidden width (PyTorch spec)
HIDDEN_PAD = 128      # lane-aligned hidden width used inside the kernel
MAX_TILE_B = 1024     # batch rows per grid step (upper bound)


def _cdiv(a, b):
    return -(-a // b)


def _round_up(n, m):
    return ((n + m - 1) // m) * m


def _pick_tile_b(B):
    """Batch tile size: big tiles, no blow-up near tile boundaries, >=2 grid
    steps for mid-size batches so both v7x TensorCores get work."""
    if B <= 16:
        return B                              # single full-array tile (always legal)
    num_tiles = max(2, _cdiv(B, MAX_TILE_B))  # >=2 steps for megacore sharding
    return _round_up(_cdiv(B, num_tiles), 8)


def _mlp_kernel(x_ref, w1_ref, b1_ref, w2_ref, b2_ref, w3_ref, b3_ref, o_ref):
    # Fully fused in VMEM: three MXU matmuls (bf16 operands, f32 accumulation),
    # bias adds and ReLUs in f32 on the VPU.  Biases are [1, N] and broadcast.
    x = x_ref[...]                                                    # bf16
    h1 = jnp.dot(x, w1_ref[...], preferred_element_type=jnp.float32)
    h1 = jnp.maximum(h1 + b1_ref[...], 0.0)                           # f32
    h2 = jnp.dot(h1.astype(jnp.bfloat16), w2_ref[...],
                 preferred_element_type=jnp.float32)
    h2 = jnp.maximum(h2 + b2_ref[...], 0.0)                           # f32
    y = jnp.dot(h2.astype(jnp.bfloat16), w3_ref[...],
                preferred_element_type=jnp.float32)
    o_ref[...] = (y + b3_ref[...]).astype(o_ref.dtype)


def prepare_params(params):
    """One-time pad (hidden 100 -> 128) + bf16 cast of weights; biases stay f32.

    Logical weights are stored [in_dim, out_dim] (transpose of PyTorch [out,in]).
    Output feature dim is intentionally NOT lane-padded (see header)."""
    hp = HIDDEN_PAD - HIDDEN
    return {
        "w1": jnp.pad(params["w1"], ((0, 0), (0, hp))).astype(jnp.bfloat16),
        "b1": jnp.pad(params["b1"], ((0, 0), (0, hp))).astype(jnp.float32),
        "w2": jnp.pad(params["w2"], ((0, hp), (0, hp))).astype(jnp.bfloat16),
        "b2": jnp.pad(params["b2"], ((0, 0), (0, hp))).astype(jnp.float32),
        "w3": jnp.pad(params["w3"], ((0, hp), (0, 0))).astype(jnp.bfloat16),
        "b3": params["b3"].astype(jnp.float32),
    }


def _vmem_estimate(tile_b, inp_dim, out_dim):
    bf2, f4 = 2, 4
    x_bytes = 2 * tile_b * inp_dim * bf2                       # double-buffered x tile
    o_bytes = 2 * tile_b * out_dim * f4                        # double-buffered out tile
    w_bytes = 2 * bf2 * (inp_dim * HIDDEN_PAD
                         + HIDDEN_PAD * HIDDEN_PAD
                         + HIDDEN_PAD * out_dim)               # resident weights (x2 bufs)
    b_bytes = 2 * f4 * (2 * HIDDEN_PAD + out_dim)
    tmp_bytes = 3 * tile_b * HIDDEN_PAD * f4                   # h1/h2/y live values
    return x_bytes + o_bytes + w_bytes + b_bytes + tmp_bytes


def vanilla_mlp_forward(x, prepared):
    """x: [B, inp_dim] float32 (or bf16); prepared: output of prepare_params."""
    B, inp_dim = x.shape
    out_dim = prepared["w3"].shape[1]

    x = x.astype(jnp.bfloat16)

    tile_b = _pick_tile_b(B)
    grid = (_cdiv(B, tile_b),)   # ragged last tile handled by Pallas edge clipping

    vmem_limit = int(min(64 << 20, max(16 << 20,
                                       4 * _vmem_estimate(tile_b, inp_dim, out_dim))))

    out = pl.pallas_call(
        _mlp_kernel,
        out_shape=jax.ShapeDtypeStruct((B, out_dim), jnp.float32),
        grid=grid,
        in_specs=[
            # x tile: pipelined across the batch grid (full feature dim per tile;
            # do NOT lane-pad the input side -- kernel is mem/step bound).
            pl.BlockSpec((tile_b, inp_dim), lambda i: (i, 0)),
            # Weights / biases: constant index maps -> DMA'd once, VMEM-resident.
            pl.BlockSpec((inp_dim, HIDDEN_PAD), lambda i: (0, 0)),
            pl.BlockSpec((1, HIDDEN_PAD), lambda i: (0, 0)),
            pl.BlockSpec((HIDDEN_PAD, HIDDEN_PAD), lambda i: (0, 0)),
            pl.BlockSpec((1, HIDDEN_PAD), lambda i: (0, 0)),
            pl.BlockSpec((HIDDEN_PAD, out_dim), lambda i: (0, 0)),
            pl.BlockSpec((1, out_dim), lambda i: (0, 0)),
        ],
        out_specs=pl.BlockSpec((tile_b, out_dim), lambda i: (i, 0)),
        compiler_params=pltpu.CompilerParams(
            dimension_semantics=("parallel",),   # v7x: shard batch grid over 2 TCs
            vmem_limit_bytes=vmem_limit,
        ),
    )(x, prepared["w1"], prepared["b1"], prepared["w2"], prepared["b2"],
      prepared["w3"], prepared["b3"])
    return out


def init_params(key, inp_dim, out_dim):
    """Deterministic init mimicking PyTorch nn.Linear default (U(+-1/sqrt(fan_in))).

    Weights stored as [in_dim, out_dim] at their logical (unpadded) shapes, f32."""
    dims = [(inp_dim, HIDDEN), (HIDDEN, HIDDEN), (HIDDEN, out_dim)]
    params = {}
    for i, (fan_in, fan_out) in enumerate(dims, start=1):
        key, kw, kb = jax.random.split(key, 3)
        bound = 1.0 / math.sqrt(fan_in)
        params[f"w{i}"] = jax.random.uniform(
            kw, (fan_in, fan_out), jnp.float32, minval=-bound, maxval=bound)
        params[f"b{i}"] = jax.random.uniform(
            kb, (1, fan_out), jnp.float32, minval=-bound, maxval=bound)
    return params


def reference_forward_f32(x, params):
    h1 = jnp.maximum(x @ params["w1"] + params["b1"], 0.0)
    h2 = jnp.maximum(h1 @ params["w2"] + params["b2"], 0.0)
    return h2 @ params["w3"] + params["b3"]


def reference_forward_bf16(x, params):
    """Reference with the same bf16-operand / f32-accumulate numerics as the kernel."""
    def dot(a, w):
        return jnp.dot(a.astype(jnp.bfloat16), w.astype(jnp.bfloat16),
                       preferred_element_type=jnp.float32)
    h1 = jnp.maximum(dot(x, params["w1"]) + params["b1"], 0.0)
    h2 = jnp.maximum(dot(h1, params["w2"]) + params["b2"], 0.0)
    return dot(h2, params["w3"]) + params["b3"]


if __name__ == "__main__":
    inp_dim, out_dim = 32, 16
    key = jax.random.PRNGKey(0)
    key, kp = jax.random.split(key)

    params = init_params(kp, inp_dim, out_dim)
    prepared = prepare_params(params)   # pad + bf16 cast once, reused across calls

    # Exercise: small aligned batch, ragged multi-tile batch, tiny single-tile batch.
    for batch in (8, 37, 3):
        key, kx = jax.random.split(key)
        x = jax.random.normal(kx, (batch, inp_dim), dtype=jnp.float32)

        out = jax.block_until_ready(vanilla_mlp_forward(x, prepared))
        assert out.shape == (batch, out_dim)

        ref_bf16 = reference_forward_bf16(x, params)
        ref_f32 = reference_forward_f32(x, params)
        assert jnp.allclose(out, ref_bf16, atol=1e-2, rtol=1e-2), \
            f"bf16-ref mismatch at batch={batch}"
        assert jnp.allclose(out, ref_f32, atol=1e-1, rtol=1e-1), \
            f"f32-ref mismatch at batch={batch}"

    print("KERNEL_OK")
</pallas_src>

<mosaic_0001>
module attributes {stable_mosaic.version = 11 : i64} {
  func.func @_mlp_kernel(%arg0: i32, %arg1: memref<8x32xbf16, #tpu.memory_space<vmem>>, %arg2: memref<32x128xbf16, #tpu.memory_space<vmem>>, %arg3: memref<1x128xf32, #tpu.memory_space<vmem>>, %arg4: memref<128x128xbf16, #tpu.memory_space<vmem>>, %arg5: memref<1x128xf32, #tpu.memory_space<vmem>>, %arg6: memref<128x16xbf16, #tpu.memory_space<vmem>>, %arg7: memref<1x16xf32, #tpu.memory_space<vmem>>, %arg8: memref<8x16xf32, #tpu.memory_space<vmem>>) attributes {dimension_semantics = [#tpu.dimension_semantics<parallel>], iteration_bounds = array<i64: 1>, scalar_prefetch = 0 : i64, scratch_operands = 0 : i64, tpu.core_type = #tpu.core_type<tc>, window_params = [{transform_indices = @transform_0, window_bounds = array<i64: 8, 32>}, {pipeline_mode = #tpu.pipeline_mode<synchronous>, transform_indices = @transform_1, window_bounds = array<i64: 32, 128>}, {pipeline_mode = #tpu.pipeline_mode<synchronous>, transform_indices = @transform_2, window_bounds = array<i64: 1, 128>}, {pipeline_mode = #tpu.pipeline_mode<synchronous>, transform_indices = @transform_3, window_bounds = array<i64: 128, 128>}, {pipeline_mode = #tpu.pipeline_mode<synchronous>, transform_indices = @transform_4, window_bounds = array<i64: 1, 128>}, {pipeline_mode = #tpu.pipeline_mode<synchronous>, transform_indices = @transform_5, window_bounds = array<i64: 128, 16>}, {pipeline_mode = #tpu.pipeline_mode<synchronous>, transform_indices = @transform_6, window_bounds = array<i64: 1, 16>}, {transform_indices = @transform_7, window_bounds = array<i64: 8, 16>}]} {
    %c0 = arith.constant 0 : index
    %c0_0 = arith.constant 0 : index
    %0 = vector.load %arg1[%c0, %c0_0] : memref<8x32xbf16, #tpu.memory_space<vmem>>, vector<8x32xbf16>
    %c0_1 = arith.constant 0 : index
    %c0_2 = arith.constant 0 : index
    %1 = vector.load %arg2[%c0_1, %c0_2] : memref<32x128xbf16, #tpu.memory_space<vmem>>, vector<32x128xbf16>
    %cst = arith.constant dense<0.000000e+00> : vector<8x128xf32>
    %2 = tpu.matmul %0, %1, %cst {dimension_numbers = #tpu.dot_dimension_numbers<[1], [0], [0], [1], [0, 0, 1, 1], [], []>} : vector<8x32xbf16>, vector<32x128xbf16>, vector<8x128xf32> -> vector<8x128xf32>
    %c0_3 = arith.constant 0 : index
    %c0_4 = arith.constant 0 : index
    %3 = vector.load %arg3[%c0_3, %c0_4] : memref<1x128xf32, #tpu.memory_space<vmem>>, vector<1x128xf32>
    %4 = vector.broadcast %3 : vector<1x128xf32> to vector<8x128xf32>
    %5 = arith.addf %2, %4 : vector<8x128xf32>
    %cst_5 = arith.constant 0.000000e+00 : f32
    %6 = vector.broadcast %cst_5 : f32 to vector<8x128xf32>
    %7 = arith.maximumf %5, %6 : vector<8x128xf32>
    %8 = arith.truncf %7 : vector<8x128xf32> to vector<8x128xbf16>
    %c0_6 = arith.constant 0 : index
    %c0_7 = arith.constant 0 : index
    %9 = vector.load %arg4[%c0_6, %c0_7] : memref<128x128xbf16, #tpu.memory_space<vmem>>, vector<128x128xbf16>
    %cst_8 = arith.constant dense<0.000000e+00> : vector<8x128xf32>
    %10 = tpu.matmul %8, %9, %cst_8 {dimension_numbers = #tpu.dot_dimension_numbers<[1], [0], [0], [1], [0, 0, 1, 1], [], []>} : vector<8x128xbf16>, vector<128x128xbf16>, vector<8x128xf32> -> vector<8x128xf32>
    %c0_9 = arith.constant 0 : index
    %c0_10 = arith.constant 0 : index
    %11 = vector.load %arg5[%c0_9, %c0_10] : memref<1x128xf32, #tpu.memory_space<vmem>>, vector<1x128xf32>
    %12 = vector.broadcast %11 : vector<1x128xf32> to vector<8x128xf32>
    %13 = arith.addf %10, %12 : vector<8x128xf32>
    %cst_11 = arith.constant 0.000000e+00 : f32
    %14 = vector.broadcast %cst_11 : f32 to vector<8x128xf32>
    %15 = arith.maximumf %13, %14 : vector<8x128xf32>
    %16 = arith.truncf %15 : vector<8x128xf32> to vector<8x128xbf16>
    %c0_12 = arith.constant 0 : index
    %c0_13 = arith.constant 0 : index
    %17 = vector.load %arg6[%c0_12, %c0_13] : memref<128x16xbf16, #tpu.memory_space<vmem>>, vector<128x16xbf16>
    %cst_14 = arith.constant dense<0.000000e+00> : vector<8x16xf32>
    %18 = tpu.matmul %16, %17, %cst_14 {dimension_numbers = #tpu.dot_dimension_numbers<[1], [0], [0], [1], [0, 0, 1, 1], [], []>} : vector<8x128xbf16>, vector<128x16xbf16>, vector<8x16xf32> -> vector<8x16xf32>
    %c0_15 = arith.constant 0 : index
    %c0_16 = arith.constant 0 : index
    %19 = vector.load %arg7[%c0_15, %c0_16] : memref<1x16xf32, #tpu.memory_space<vmem>>, vector<1x16xf32>
    %20 = vector.broadcast %19 : vector<1x16xf32> to vector<8x16xf32>
    %21 = arith.addf %18, %20 : vector<8x16xf32>
    %c0_17 = arith.constant 0 : index
    %c0_18 = arith.constant 0 : index
    %22 = vector.load %arg8[%c0_17, %c0_18] : memref<8x16xf32, #tpu.memory_space<vmem>>, vector<8x16xf32>
    tpu.vector_store %arg8[%c0_17, %c0_18], %21 {strides = array<i32>} : memref<8x16xf32, #tpu.memory_space<vmem>>, vector<8x16xf32>,
    return
  }
  func.func @transform_0(%arg0: i32) -> (i32, i32) {
    %c0_i32 = arith.constant 0 : i32
    %c0_i32_0 = arith.constant 0 : i32
    return %arg0, %c0_i32 : i32, i32
  }
  func.func @transform_1(%arg0: i32) -> (i32, i32) {
    %c0_i32 = arith.constant 0 : i32
    %c0_i32_0 = arith.constant 0 : i32
    %c0_i32_1 = arith.constant 0 : i32
    return %c0_i32, %c0_i32_0 : i32, i32
  }
  func.func @transform_2(%arg0: i32) -> (i32, i32) {
    %c0_i32 = arith.constant 0 : i32
    %c0_i32_0 = arith.constant 0 : i32
    %c0_i32_1 = arith.constant 0 : i32
    return %c0_i32, %c0_i32_0 : i32, i32
  }
  func.func @transform_3(%arg0: i32) -> (i32, i32) {
    %c0_i32 = arith.constant 0 : i32
    %c0_i32_0 = arith.constant 0 : i32
    %c0_i32_1 = arith.constant 0 : i32
    return %c0_i32, %c0_i32_0 : i32, i32
  }
  func.func @transform_4(%arg0: i32) -> (i32, i32) {
    %c0_i32 = arith.constant 0 : i32
    %c0_i32_0 = arith.constant 0 : i32
    %c0_i32_1 = arith.constant 0 : i32
    return %c0_i32, %c0_i32_0 : i32, i32
  }
  func.func @transform_5(%arg0: i32) -> (i32, i32) {
    %c0_i32 = arith.constant 0 : i32
    %c0_i32_0 = arith.constant 0 : i32
    %c0_i32_1 = arith.constant 0 : i32
    return %c0_i32, %c0_i32_0 : i32, i32
  }
  func.func @transform_6(%arg0: i32) -> (i32, i32) {
    %c0_i32 = arith.constant 0 : i32
    %c0_i32_0 = arith.constant 0 : i32
    %c0_i32_1 = arith.constant 0 : i32
    return %c0_i32, %c0_i32_0 : i32, i32
  }
  func.func @transform_7(%arg0: i32) -> (i32, i32) {
    %c0_i32 = arith.constant 0 : i32
    %c0_i32_0 = arith.constant 0 : i32
    return %arg0, %c0_i32 : i32, i32
  }
}

</mosaic_0001>

<llo_original>
// kernel: tpu_custom_call.1
$region0: #{tpu_custom_call.1}
  #allocation0 [shape = 'u32[]', space=smem, size = 0x4, offset = 0x4, fixed_abs, tag = 'smem constant byte address 0x4 - core index']
  #allocation1 [shape = 'u32[144,128]{1,0:T(1,128)}', space=vmem, size = 0x12000, scoped, tag = 'internal scratch']
  %s0 = inlined_call_operand.hbm [shape: bf16[8,32], index: 0, kind: input, shape index: {}]
  %s1 = inlined_call_operand.vmem [shape: bf16[32,128], index: 1, kind: input, shape index: {}]
  %s2 = inlined_call_operand.vmem [shape: f32[1,128], index: 2, kind: input, shape index: {}]
  %s3 = inlined_call_operand.vmem [shape: bf16[128,128], index: 3, kind: input, shape index: {}]
  %s4 = inlined_call_operand.vmem [shape: f32[1,128], index: 4, kind: input, shape index: {}]
  %s5 = inlined_call_operand.vmem [shape: bf16[128,16], index: 5, kind: input, shape index: {}]
  %s6 = inlined_call_operand.vmem [shape: f32[1,16], index: 6, kind: input, shape index: {}]
  %s7 = inlined_call_operand.hbm [shape: f32[8,16], index: 7, kind: output, shape index: {}]
  %s8 = sld [smem:[#allocation0]]
  $region42: #{tpu_custom_call.1} parent=0
    _
  %s10 = ssub.s32 1, %s8
  %s11 = scalar_select 0, %s10, %s8
  $region1: #{tpu_custom_call.1} parent=0
    #allocation2 [shape = 'u8[2048]{0}', space=vmem, size = 0x800, scoped, tag = 'input window, operand 0, single buffered']
    #allocation3 [shape = 's32[1]{0}', space=sflag, size = 0x4, scoped, tag = 'scoped memory for tpu_custom_call.1']
    #allocation4 [shape = 's32[1]{0}', space=sflag, size = 0x4, scoped, tag = 'scoped memory for tpu_custom_call.1']
    #allocation5 [shape = 'u8[4096]{0}', space=vmem, size = 0x1000, scoped, tag = 'output window, operand 0, single buffered']
    %12 = vsyncpa [#allocation3], 0
    %13 = vsyncpa [#allocation4], 0
    // Predicated region
    $region2: #{tpu_custom_call.1} parent=1 // pred_check
      _
    $region3: #{tpu_custom_call.1} parent=1 // pred_check_branch
      %15 = sbr.rel (0) target = $region5
    $region4: #{tpu_custom_call.1} parent=1 // pred_region
      %s17 = ssub.s32 64, 64
      %18 = vsyncadd [#allocation3], %s17
      %s20 = sshll.u32 [#allocation2], 4
      %s21 = int_to_ptr.vmem [resolvable:$true] %s20
      %23 = dma.hbm_to_vmem [thread:$0]  %s0, 64, %s21, [#allocation3]
    $region5: #{tpu_custom_call.1} parent=1 // pred_fallthru
      _
    // Predicated region
    $region6: #{tpu_custom_call.1} parent=1 // pred_check
      _
    $region7: #{tpu_custom_call.1} parent=1 // pred_check_branch
      %25 = sbr.rel (0) target = $region9
    $region8: #{tpu_custom_call.1} parent=1 // pred_region
      _
    $region9: #{tpu_custom_call.1} parent=1 // pred_fallthru
      _
    // Predicated region
    $region10: #{tpu_custom_call.1} parent=1 // pred_check
      _
    $region11: #{tpu_custom_call.1} parent=1 // pred_check_branch
      %27 = sbr.rel (0) target = $region13
    $region12: #{tpu_custom_call.1} parent=1 // pred_region
      _
    $region13: #{tpu_custom_call.1} parent=1 // pred_fallthru
      _
    // Predicated region
    $region14: #{tpu_custom_call.1} parent=1 // pred_check
      _
    $region15: #{tpu_custom_call.1} parent=1 // pred_check_branch
      %29 = sbr.rel (0) target = $region17
    $region16: #{tpu_custom_call.1} parent=1 // pred_region
      _
    $region17: #{tpu_custom_call.1} parent=1 // pred_fallthru
      _
    // Predicated region
    $region18: #{tpu_custom_call.1} parent=1 // pred_check
      _
    $region19: #{tpu_custom_call.1} parent=1 // pred_check_branch
      %31 = sbr.rel (0) target = $region21
    $region20: #{tpu_custom_call.1} parent=1 // pred_region
      _
    $region21: #{tpu_custom_call.1} parent=1 // pred_fallthru
      _
    // Predicated region
    $region22: #{tpu_custom_call.1} parent=1 // pred_check
      _
    $region23: #{tpu_custom_call.1} parent=1 // pred_check_branch
      %33 = sbr.rel (0) target = $region25
    $region24: #{tpu_custom_call.1} parent=1 // pred_region
      _
    $region25: #{tpu_custom_call.1} parent=1 // pred_fallthru
      _
    // Predicated region
    $region26: #{tpu_custom_call.1} parent=1 // pred_check
      _
    $region27: #{tpu_custom_call.1} parent=1 // pred_check_branch
      %35 = sbr.rel (0) target = $region29
    $region28: #{tpu_custom_call.1} parent=1 // pred_region
      _
    $region29: #{tpu_custom_call.1} parent=1 // pred_fallthru
      _
    // Predicated region
    $region30: #{tpu_custom_call.1} parent=1 // pred_check
      _
    $region31: #{tpu_custom_call.1} parent=1 // pred_check_branch
      %37 = sbr.rel (0) target = $region33
    $region32: #{tpu_custom_call.1} parent=1 // pred_region
      %38 = dma.done [#allocation3], 64
    $region33: #{tpu_custom_call.1} parent=1 // pred_fallthru
      _
    %v40 = vld [vmem:[#allocation2] sm:$0xf]
    %v41 = vld [vmem:[%s1] sm:$0xf]
    %v42 = vld [vmem:[%s1 + $0x4] sm:$0xf]
    %v43 = vld [vmem:[%s1 + $0x8] sm:$0xf]
    %v44 = vld [vmem:[%s1 + $0xc] sm:$0xf]
    %v45 = vld [vmem:[%s2] sm:$0x1]
    %v47 = vlaneseq
    %v48 = vshrl.u32 %v47, 7
    %v49 = vsub.s32 0, %v48
    %v50 = vrot.slane %v45, %v49
    %v56 = vunpack.c.l.b16 %v41
    %v57 = vunpack.c.l.b16 %v42
    %v58 = vunpack.c.l.b16 %v43
    %v59 = vunpack.c.l.b16 %v44
    %v60 = vpack.c.b16 %v57, %v56
    %v61 = vpack.c.b16 %v59, %v58
    %vm64 = vcmask 261120
    %v66 = vsel %vm64, %v40, 0
    %68 = vmatprep.subr.bf16.mxu0 0
    %69 = vmatpush1.bf16.msra.mxu0 %v60
    %70 = vmatprep.subr.bf16.mxu0 0
    %71 = vmatpush1.bf16.msra.mxu0 %v61
    %72 = vmatprep.subr.bf16.mxu0 0
    %73 = vmatpush1.bf16.msra.mxu0 0
    %74 = vmatprep.subr.bf16.mxu0 0
    %75 = vmatpush1.bf16.msra.mxu0 0
    %76 = vmatprep.subr.bf16.mxu0 0
    %77 = vmatpush1.bf16.msra.mxu0 0
    %78 = vmatprep.subr.bf16.mxu0 0
    %79 = vmatpush1.bf16.msra.mxu0 0
    %80 = vmatprep.subr.bf16.mxu0 0
    %81 = vmatpush1.bf16.msra.mxu0 0
    %82 = vmatprep.subr.bf16.mxu0 0
    %83 = vmatpush1.bf16.msra.mxu0 0
    %84 = vmatprep.subr.bf16.mxu0 0
    %85 = vmatpush1.bf16.msra.mxu0 0
    %86 = vmatprep.subr.bf16.mxu0 0
    %87 = vmatpush1.bf16.msra.mxu0 0
    %88 = vmatprep.subr.bf16.mxu0 0
    %89 = vmatpush1.bf16.msra.mxu0 0
    %90 = vmatprep.subr.bf16.mxu0 0
    %91 = vmatpush1.bf16.msra.mxu0 0
    %92 = vmatprep.subr.bf16.mxu0 0
    %93 = vmatpush1.bf16.msra.mxu0 0
    %94 = vmatprep.subr.bf16.mxu0 0
    %95 = vmatpush1.bf16.msra.mxu0 0
    %96 = vmatprep.subr.bf16.mxu0 0
    %97 = vmatpush1.bf16.msra.mxu0 0
    %98 = vmatprep.subr.bf16.mxu0 0
    %99 = vmatpush1.bf16.msra.mxu0 0
    %100 = vmatprep.mubr.bf16.mxu0 0
    %101 = vmatmul.mubr.bf16.gmra.mrb[0].mxu0 %v66
    %v102 = vpop.f32.mrb[0].mxu0
    %v103 = vadd.f32 %v50, %v102
    %v104 = vpop.f32.mrb[0].mxu0
    %v105 = vpop.f32.mrb[0].mxu0
    %v106 = vpop.f32.mrb[0].mxu0
    %107 = vdwg.mxu0
    %v108 = vmax.f32 %v103, 0.0
    %v109 = vpack.c.bf16 %v108, %v108
    %v110 = vld [vmem:[%s3] sm:$0xf]
    %v111 = vld [vmem:[%s3 + $0x4] sm:$0xf]
    %v112 = vld [vmem:[%s3 + $0x8] sm:$0xf]
    %v113 = vld [vmem:[%s3 + $0xc] sm:$0xf]
    %v114 = vld [vmem:[%s3 + $0x10] sm:$0xf]
    %v115 = vld [vmem:[%s3 + $0x14] sm:$0xf]
    %v116 = vld [vmem:[%s3 + $0x18] sm:$0xf]
    %v117 = vld [vmem:[%s3 + $0x1c] sm:$0xf]
    %v118 = vld [vmem:[%s3 + $0x20] sm:$0xf]
    %v119 = vld [vmem:[%s3 + $0x24] sm:$0xf]
    %v120 = vld [vmem:[%s3 + $0x28] sm:$0xf]
    %v121 = vld [vmem:[%s3 + $0x2c] sm:$0xf]
    %v122 = vld [vmem:[%s3 + $0x30] sm:$0xf]
    %v123 = vld [vmem:[%s3 + $0x34] sm:$0xf]
    %v124 = vld [vmem:[%s3 + $0x38] sm:$0xf]
    %v125 = vld [vmem:[%s3 + $0x3c] sm:$0xf]
    %v126 = vld [vmem:[%s4] sm:$0x1]
    %v128 = vlaneseq
    %v129 = vshrl.u32 %v128, 7
    %v130 = vsub.s32 0, %v129
    %v131 = vrot.slane %v126, %v130
    %v149 = vunpack.c.l.b16 %v110
    %v150 = vunpack.c.l.b16 %v111
    %v151 = vunpack.c.l.b16 %v112
    %v152 = vunpack.c.l.b16 %v113
    %v153 = vunpack.c.l.b16 %v114
    %v154 = vunpack.c.l.b16 %v115
    %v155 = vunpack.c.l.b16 %v116
    %v156 = vunpack.c.l.b16 %v117
    %v157 = vunpack.c.l.b16 %v118
    %v158 = vunpack.c.l.b16 %v119
    %v159 = vunpack.c.l.b16 %v120
    %v160 = vunpack.c.l.b16 %v121
    %v161 = vunpack.c.l.b16 %v122
    %v162 = vunpack.c.l.b16 %v123
    %v163 = vunpack.c.l.b16 %v124
    %v164 = vunpack.c.l.b16 %v125
    %v165 = vpack.c.b16 %v150, %v149
    %v166 = vpack.c.b16 %v152, %v151
    %v167 = vpack.c.b16 %v154, %v153
    %v168 = vpack.c.b16 %v156, %v155
    %v169 = vpack.c.b16 %v158, %v157
    %v170 = vpack.c.b16 %v160, %v159
    %v171 = vpack.c.b16 %v162, %v161
    %v172 = vpack.c.b16 %v164, %v163
    %181 = vmatprep.subr.bf16.mxu0 0
    %182 = vmatpush1.bf16.msra.mxu0 %v165
    %183 = vmatprep.subr.bf16.mxu0 0
    %184 = vmatpush1.bf16.msra.mxu0 %v166
    %185 = vmatprep.subr.bf16.mxu0 0
    %186 = vmatpush1.bf16.msra.mxu0 %v167
    %187 = vmatprep.subr.bf16.mxu0 0
    %188 = vmatpush1.bf16.msra.mxu0 %v168
    %189 = vmatprep.subr.bf16.mxu0 0
    %190 = vmatpush1.bf16.msra.mxu0 %v169
    %191 = vmatprep.subr.bf16.mxu0 0
    %192 = vmatpush1.bf16.msra.mxu0 %v170
    %193 = vmatprep.subr.bf16.mxu0 0
    %194 = vmatpush1.bf16.msra.mxu0 %v171
    %195 = vmatprep.subr.bf16.mxu0 0
    %196 = vmatpush1.bf16.msra.mxu0 %v172
    %197 = vmatprep.subr.bf16.mxu0 0
    %198 = vmatpush1.bf16.msra.mxu0 0
    %199 = vmatprep.subr.bf16.mxu0 0
    %200 = vmatpush1.bf16.msra.mxu0 0
    %201 = vmatprep.subr.bf16.mxu0 0
    %202 = vmatpush1.bf16.msra.mxu0 0
    %203 = vmatprep.subr.bf16.mxu0 0
    %204 = vmatpush1.bf16.msra.mxu0 0
    %205 = vmatprep.subr.bf16.mxu0 0
    %206 = vmatpush1.bf16.msra.mxu0 0
    %207 = vmatprep.subr.bf16.mxu0 0
    %208 = vmatpush1.bf16.msra.mxu0 0
    %209 = vmatprep.subr.bf16.mxu0 0
    %210 = vmatpush1.bf16.msra.mxu0 0
    %211 = vmatprep.subr.bf16.mxu0 0
    %212 = vmatpush1.bf16.msra.mxu0 0
    %213 = vmatprep.mubr.bf16.mxu0 0
    %214 = vmatmul.mubr.bf16.gmra.mrb[0].mxu0 %v109
    %v215 = vpop.f32.mrb[0].mxu0
    %v216 = vadd.f32 %v131, %v215
    %v217 = vpop.f32.mrb[0].mxu0
    %v218 = vpop.f32.mrb[0].mxu0
    %v219 = vpop.f32.mrb[0].mxu0
    %220 = vdwg.mxu0
    %v221 = vmax.f32 %v216, 0.0
    %v222 = vpack.c.bf16 %v221, %v221
    %v223 = vld [vmem:[%s5] sm:$0xf]
    %v224 = vld [vmem:[%s5 + $0x4] sm:$0xf]
    %v225 = vld [vmem:[%s5 + $0x8] sm:$0xf]
    %v226 = vld [vmem:[%s5 + $0xc] sm:$0xf]
    %v227 = vld [vmem:[%s5 + $0x10] sm:$0xf]
    %v228 = vld [vmem:[%s5 + $0x14] sm:$0xf]
    %v229 = vld [vmem:[%s5 + $0x18] sm:$0xf]
    %v230 = vld [vmem:[%s5 + $0x1c] sm:$0xf]
    %v231 = vld [vmem:[%s5 + $0x20] sm:$0xf]
    %v232 = vld [vmem:[%s5 + $0x24] sm:$0xf]
    %v233 = vld [vmem:[%s5 + $0x28] sm:$0xf]
    %v234 = vld [vmem:[%s5 + $0x2c] sm:$0xf]
    %v235 = vld [vmem:[%s5 + $0x30] sm:$0xf]
    %v236 = vld [vmem:[%s5 + $0x34] sm:$0xf]
    %v237 = vld [vmem:[%s5 + $0x38] sm:$0xf]
    %v238 = vld [vmem:[%s5 + $0x3c] sm:$0xf]
    %v239 = vld [vmem:[%s6] sm:$0x1]
    %v241 = vlaneseq
    %v242 = vshrl.u32 %v241, 7
    %v243 = vsub.s32 0, %v242
    %v244 = vrot.slane %v239, %v243
    %v262 = vunpack.c.l.b16 %v223
    %v263 = vunpack.c.l.b16 %v224
    %v264 = vunpack.c.l.b16 %v225
    %v265 = vunpack.c.l.b16 %v226
    %v266 = vunpack.c.l.b16 %v227
    %v267 = vunpack.c.l.b16 %v228
    %v268 = vunpack.c.l.b16 %v229
    %v269 = vunpack.c.l.b16 %v230
    %v270 = vunpack.c.l.b16 %v231
    %v271 = vunpack.c.l.b16 %v232
    %v272 = vunpack.c.l.b16 %v233
    %v273 = vunpack.c.l.b16 %v234
    %v274 = vunpack.c.l.b16 %v235
    %v275 = vunpack.c.l.b16 %v236
    %v276 = vunpack.c.l.b16 %v237
    %v277 = vunpack.c.l.b16 %v238
    %v278 = vpack.c.b16 %v263, %v262
    %v279 = vpack.c.b16 %v265, %v264
    %v280 = vpack.c.b16 %v267, %v266
    %v281 = vpack.c.b16 %v269, %v268
    %v282 = vpack.c.b16 %v271, %v270
    %v283 = vpack.c.b16 %v273, %v272
    %v284 = vpack.c.b16 %v275, %v274
    %v285 = vpack.c.b16 %v277, %v276
    %294 = vmatprep.subr.bf16.mxu0 0
    %295 = vmatpush1.bf16.msra.mxu0 %v278
    %296 = vmatprep.subr.bf16.mxu0 0
    %297 = vmatpush1.bf16.msra.mxu0 %v279
    %298 = vmatprep.subr.bf16.mxu0 0
    %299 = vmatpush1.bf16.msra.mxu0 %v280
    %300 = vmatprep.subr.bf16.mxu0 0
    %301 = vmatpush1.bf16.msra.mxu0 %v281
    %302 = vmatprep.subr.bf16.mxu0 0
    %303 = vmatpush1.bf16.msra.mxu0 %v282
    %304 = vmatprep.subr.bf16.mxu0 0
    %305 = vmatpush1.bf16.msra.mxu0 %v283
    %306 = vmatprep.subr.bf16.mxu0 0
    %307 = vmatpush1.bf16.msra.mxu0 %v284
    %308 = vmatprep.subr.bf16.mxu0 0
    %309 = vmatpush1.bf16.msra.mxu0 %v285
    %310 = vmatprep.subr.bf16.mxu0 0
    %311 = vmatpush1.bf16.msra.mxu0 0
    %312 = vmatprep.subr.bf16.mxu0 0
    %313 = vmatpush1.bf16.msra.mxu0 0
    %314 = vmatprep.subr.bf16.mxu0 0
    %315 = vmatpush1.bf16.msra.mxu0 0
    %316 = vmatprep.subr.bf16.mxu0 0
    %317 = vmatpush1.bf16.msra.mxu0 0
    %318 = vmatprep.subr.bf16.mxu0 0
    %319 = vmatpush1.bf16.msra.mxu0 0
    %320 = vmatprep.subr.bf16.mxu0 0
    %321 = vmatpush1.bf16.msra.mxu0 0
    %322 = vmatprep.subr.bf16.mxu0 0
    %323 = vmatpush1.bf16.msra.mxu0 0
    %324 = vmatprep.subr.bf16.mxu0 0
    %325 = vmatpush1.bf16.msra.mxu0 0
    %326 = vmatprep.mubr.bf16.mxu0 0
    %327 = vmatmul.mubr.bf16.gmra.mrb[0].mxu0 %v222
    %v328 = vpop.f32.mrb[0].mxu0
    %v329 = vadd.f32 %v244, %v328
    %v330 = vpop.f32.mrb[0].mxu0
    %v331 = vpop.f32.mrb[0].mxu0
    %v332 = vpop.f32.mrb[0].mxu0
    %333 = vdwg.mxu0
    %vm334 = vcmask 130048
    %335 = vst.msk [vmem:[#allocation5] sm:$0xff] %vm334, %v329
    // Predicated region
    $region34: #{tpu_custom_call.1} parent=1 // pred_check
      _
    $region35: #{tpu_custom_call.1} parent=1 // pred_check_branch
      %337 = sbr.rel (0) target = $region37
    $region36: #{tpu_custom_call.1} parent=1 // pred_region
      %s339 = ssub.s32 128, 128
      %340 = vsyncadd [#allocation4], %s339
      %s342 = sshll.u32 [#allocation5], 4
      %s343 = int_to_ptr.vmem [resolvable:$true] %s342
      %345 = dma.vmem_to_hbm [thread:$0]  %s343, 128, %s7, [#allocation4]
    $region37: #{tpu_custom_call.1} parent=1 // pred_fallthru
      _
    // Predicated region
    $region38: #{tpu_custom_call.1} parent=1 // pred_check
      _
    $region39: #{tpu_custom_call.1} parent=1 // pred_check_branch
      %347 = sbr.rel (0) target = $region41
    $region40: #{tpu_custom_call.1} parent=1 // pred_region
      %348 = dma.done [#allocation4], 128
    $region41: #{tpu_custom_call.1} parent=1 // pred_fallthru
      _
    %349 = vsyncpa [#allocation3], 1
    %350 = vsyncpa [#allocation4], 1

</llo_original>
